<compile_context>
chip_gen: v7x
topology: tpu7x:2x2x1
jax: 0.10.0
libtpu: 0.0.40
codegen_flags: <defaults>
</compile_context>

<pallas_src>
import functools
from math import pi, sqrt

import jax
import jax.numpy as jnp
from jax.experimental import pallas as pl
from jax.experimental.pallas import tpu as pltpu


def _rff_kernel(x_ref, wT_ref, b_ref, o_ref, acc_ref, *, scale):
    """One (TM, TN) output tile, accumulated over the K (dim_in) grid axis."""
    k = pl.program_id(2)

    @pl.when(k == 0)
    def _init():
        acc_ref[...] = jnp.zeros_like(acc_ref)

    # bf16 x bf16 -> f32 accumulate on the MXU.
    acc_ref[...] += jnp.dot(
        x_ref[...].astype(jnp.bfloat16),
        wT_ref[...],
        preferred_element_type=jnp.float32,
    )

    @pl.when(k == pl.num_programs(2) - 1)
    def _epilogue():
        z = acc_ref[...] + b_ref[...]          # f32 bias add, broadcasts over rows
        o_ref[...] = (scale * jnp.cos(z)).astype(o_ref.dtype)


def _vmem_capacity_bytes():
    try:
        return int(pltpu.get_tpu_info().vmem_capacity_bytes)
    except Exception:
        return 64 << 20                        # conservative: v7x per-TensorCore VMEM


def init_rff_params(key, dim_in, dim_out, lengthscale=1.0):
    """Mirrors RffLayer.sample_features(). Returns (w_f32, wT_bf16, b_f32).

    The transpose and the bf16 cast happen once here, so the forward path never
    pays a per-call transpose / cast of a static buffer.
    """
    kw, kb = jax.random.split(key)
    w = (1.0 / lengthscale) * jax.random.normal(kw, (dim_out, dim_in), dtype=jnp.float32)
    b = jax.random.uniform(kb, (dim_out,), dtype=jnp.float32, minval=0.0, maxval=2.0 * pi)
    wT = jnp.transpose(w).astype(jnp.bfloat16)   # (dim_in, dim_out), bf16 for the MXU
    return w, wT, b


def rff_forward(x, wT, b):
    """x: (batch, dim_in) f32, wT: (dim_in, dim_out) bf16, b: (dim_out,) f32."""
    batch, dim_in = x.shape
    k_dim, dim_out = wT.shape
    assert k_dim == dim_in and b.shape == (dim_out,)
    if wT.dtype != jnp.bfloat16:
        wT = wT.astype(jnp.bfloat16)           # params should already be stored bf16
    scale = sqrt(2.0 / dim_out)

    # ---- device-derived tile caps ------------------------------------------------
    vmem = _vmem_capacity_bytes()
    big_vmem = vmem >= (100 << 20)             # v5e / v6e: 128 MiB; v7x: 64 MiB
    tm_cap = 1024 if big_vmem else 512         # multiples of 16 (bf16 sublane packing)
    tn_cap = 1024 if big_vmem else 512         # multiples of 256 (v6e/v7x 2x256^2 MXU)
    tk_cap = 2048 if big_vmem else 1024        # multiples of 128 (lane dim)

    TM = batch if batch <= tm_cap else tm_cap
    TN = dim_out if dim_out <= tn_cap else tn_cap

    # K tiling: when K does not fit in one tile, pad to a multiple of TK (zero
    # padding leaves the matmul result unchanged).
    if dim_in <= tk_cap:
        TK = dim_in
        x_p, wT_p = x, wT
    else:
        TK = tk_cap
        k_pad = (-dim_in) % TK
        if k_pad:
            x_p = jnp.pad(x, ((0, 0), (0, k_pad)))
            wT_p = jnp.pad(wT, ((0, k_pad), (0, 0)))
        else:
            x_p, wT_p = x, wT
    dim_in_p = x_p.shape[1]

    num_i = pl.cdiv(batch, TM)                 # batch strips
    num_j = pl.cdiv(dim_out, TN)               # output-feature strips
    num_k = dim_in_p // TK                     # reduction steps

    # ---- grid ordering: keep the bigger operand resident (DMA'd once) -------------
    # batch-outer order  -> extra HBM traffic = (num_i - 1) * |wT|  (wT refetched / row strip)
    # dout-outer  order  -> extra HBM traffic = (num_j - 1) * |x|   (x  refetched / col strip)
    x_bytes = 4 * batch * dim_in_p
    w_bytes = 2 * dim_in_p * dim_out
    batch_outer = (num_i - 1) * w_bytes <= (num_j - 1) * x_bytes

    if batch_outer:
        grid = (num_i, num_j, num_k)
        i_of = lambda g0, g1: g0
        j_of = lambda g0, g1: g1
    else:
        grid = (num_j, num_i, num_k)
        i_of = lambda g0, g1: g1
        j_of = lambda g0, g1: g0

    b2 = b.reshape(1, dim_out)                 # 2-D bias for clean lane broadcasting

    # ---- VMEM budget / compiler params ---------------------------------------------
    ws = (2 * (TM * TK * 4 + TK * TN * 2 + TN * 4)   # double-buffered inputs
          + 2 * TM * TN * 4                          # double-buffered output
          + TM * TN * 4)                             # f32 accumulator scratch
    vmem_limit = int(min(vmem - (8 << 20), max(32 << 20, ws + (8 << 20))))

    # ---- advisory cost estimate (accounts for refetch traffic) ----------------------
    if num_k == 1:
        x_reads, w_reads = (1, num_i) if batch_outer else (num_j, 1)
    else:
        x_reads, w_reads = num_j, num_i
    cost = pl.CostEstimate(
        flops=2 * batch * dim_in * dim_out,
        transcendentals=batch * dim_out,
        bytes_accessed=(x_reads * x_bytes + w_reads * w_bytes
                        + 4 * dim_out + 4 * batch * dim_out),
    )

    kernel = functools.partial(_rff_kernel, scale=scale)

    return pl.pallas_call(
        kernel,
        out_shape=jax.ShapeDtypeStruct((batch, dim_out), x.dtype),
        grid_spec=pltpu.PrefetchScalarGridSpec(
            num_scalar_prefetch=0,
            grid=grid,
            in_specs=[
                pl.BlockSpec((TM, TK), lambda g0, g1, k: (i_of(g0, g1), k)),           # x
                pl.BlockSpec((TK, TN), lambda g0, g1, k: (k, j_of(g0, g1))),           # wT
                pl.BlockSpec((1, TN),  lambda g0, g1, k: (0, j_of(g0, g1))),           # bias
            ],
            out_specs=pl.BlockSpec(
                (TM, TN), lambda g0, g1, k: (i_of(g0, g1), j_of(g0, g1))),
            scratch_shapes=[pltpu.VMEM((TM, TN), jnp.float32)],
        ),
        compiler_params=pltpu.CompilerParams(
            dimension_semantics=("parallel", "parallel", "arbitrary"),
            vmem_limit_bytes=vmem_limit,
        ),
        cost_estimate=cost,
    )(x_p, wT_p, b2)


def rff_reference(x, w, b):
    dim_out = w.shape[0]
    return sqrt(2.0 / dim_out) * jnp.cos(x @ w.T + b)


if __name__ == "__main__":
    # Small shapes consistent with the module: dim_in=32, dim_out=64, batch=8.
    batch, dim_in, dim_out = 8, 32, 64
    lengthscale = 1.0

    key = jax.random.PRNGKey(0)
    kx, kp = jax.random.split(key)

    x = jax.random.normal(kx, (batch, dim_in), dtype=jnp.float32)
    w, wT, b = init_rff_params(kp, dim_in, dim_out, lengthscale)

    out = jax.block_until_ready(rff_forward(x, wT, b))
    assert out.shape == (batch, dim_out)

    # Tight check vs. a reference that uses the same bf16 operands (validates kernel math).
    scale = sqrt(2.0 / dim_out)
    ref_bf16 = scale * jnp.cos(
        jnp.dot(x.astype(jnp.bfloat16), wT, preferred_element_type=jnp.float32) + b)
    assert jnp.allclose(out, ref_bf16, atol=1e-3, rtol=1e-3), "mismatch vs bf16-operand ref"

    # Loose check vs. the full-f32 PyTorch-equivalent reference (bf16 operand rounding).
    ref_f32 = rff_reference(x, w, b)
    assert jnp.allclose(out, ref_f32, atol=5e-2), "mismatch vs f32 reference"

    print("KERNEL_OK")
</pallas_src>

<mosaic_0001>
module attributes {stable_mosaic.version = 11 : i64} {
  func.func @_rff_kernel(%arg0: i32, %arg1: i32, %arg2: i32, %arg3: memref<8x32xf32, #tpu.memory_space<vmem>>, %arg4: memref<32x64xbf16, #tpu.memory_space<vmem>>, %arg5: memref<1x64xf32, #tpu.memory_space<vmem>>, %arg6: memref<8x64xf32, #tpu.memory_space<vmem>>, %arg7: memref<8x64xf32, #tpu.memory_space<vmem>>) attributes {dimension_semantics = [#tpu.dimension_semantics<parallel>, #tpu.dimension_semantics<parallel>, #tpu.dimension_semantics<arbitrary>], iteration_bounds = array<i64: 1, 1, 1>, scalar_prefetch = 0 : i64, scratch_operands = 1 : i64, tpu.core_type = #tpu.core_type<tc>, window_params = [{transform_indices = @transform_0, window_bounds = array<i64: 8, 32>}, {transform_indices = @transform_1, window_bounds = array<i64: 32, 64>}, {transform_indices = @transform_2, window_bounds = array<i64: 1, 64>}, {transform_indices = @transform_3, window_bounds = array<i64: 8, 64>}]} {
    %c0_i32 = arith.constant 0 : i32
    %0 = arith.cmpi eq, %arg2, %c0_i32 : i32
    %1 = arith.extui %0 : i1 to i32
    %c0_i32_0 = arith.constant 0 : i32
    %2 = arith.cmpi ne, %1, %c0_i32_0 : i32
    scf.if %2 {
      %cst_10 = arith.constant 0.000000e+00 : f32
      %13 = vector.broadcast %cst_10 : f32 to vector<8x64xf32>
      %c0_11 = arith.constant 0 : index
      %c0_12 = arith.constant 0 : index
      %14 = vector.load %arg7[%c0_11, %c0_12] : memref<8x64xf32, #tpu.memory_space<vmem>>, vector<8x64xf32>
      tpu.vector_store %arg7[%c0_11, %c0_12], %13 {strides = array<i32>} : memref<8x64xf32, #tpu.memory_space<vmem>>, vector<8x64xf32>,
    } else {
    }
    %c0 = arith.constant 0 : index
    %c0_1 = arith.constant 0 : index
    %3 = vector.load %arg7[%c0, %c0_1] : memref<8x64xf32, #tpu.memory_space<vmem>>, vector<8x64xf32>
    %c0_2 = arith.constant 0 : index
    %c0_3 = arith.constant 0 : index
    %4 = vector.load %arg3[%c0_2, %c0_3] : memref<8x32xf32, #tpu.memory_space<vmem>>, vector<8x32xf32>
    %5 = arith.truncf %4 : vector<8x32xf32> to vector<8x32xbf16>
    %c0_4 = arith.constant 0 : index
    %c0_5 = arith.constant 0 : index
    %6 = vector.load %arg4[%c0_4, %c0_5] : memref<32x64xbf16, #tpu.memory_space<vmem>>, vector<32x64xbf16>
    %cst = arith.constant dense<0.000000e+00> : vector<8x64xf32>
    %7 = tpu.matmul %5, %6, %cst {dimension_numbers = #tpu.dot_dimension_numbers<[1], [0], [0], [1], [0, 0, 1, 1], [], []>} : vector<8x32xbf16>, vector<32x64xbf16>, vector<8x64xf32> -> vector<8x64xf32>
    %8 = arith.addf %3, %7 : vector<8x64xf32>
    %c0_6 = arith.constant 0 : index
    %c0_7 = arith.constant 0 : index
    %9 = vector.load %arg7[%c0_6, %c0_7] : memref<8x64xf32, #tpu.memory_space<vmem>>, vector<8x64xf32>
    tpu.vector_store %arg7[%c0_6, %c0_7], %8 {strides = array<i32>} : memref<8x64xf32, #tpu.memory_space<vmem>>, vector<8x64xf32>,
    %c0_i32_8 = arith.constant 0 : i32
    %10 = arith.cmpi eq, %arg2, %c0_i32_8 : i32
    %11 = arith.extui %10 : i1 to i32
    %c0_i32_9 = arith.constant 0 : i32
    %12 = arith.cmpi ne, %11, %c0_i32_9 : i32
    scf.if %12 {
      %c0_10 = arith.constant 0 : index
      %c0_11 = arith.constant 0 : index
      %13 = vector.load %arg7[%c0_10, %c0_11] : memref<8x64xf32, #tpu.memory_space<vmem>>, vector<8x64xf32>
      %c0_12 = arith.constant 0 : index
      %c0_13 = arith.constant 0 : index
      %14 = vector.load %arg5[%c0_12, %c0_13] : memref<1x64xf32, #tpu.memory_space<vmem>>, vector<1x64xf32>
      %15 = vector.broadcast %14 : vector<1x64xf32> to vector<8x64xf32>
      %16 = arith.addf %13, %15 : vector<8x64xf32>
      %17 = math.cos %16 : vector<8x64xf32>
      %cst_14 = arith.constant 0.176776692 : f32
      %18 = vector.broadcast %cst_14 : f32 to vector<8x64xf32>
      %19 = arith.mulf %18, %17 : vector<8x64xf32>
      %c0_15 = arith.constant 0 : index
      %c0_16 = arith.constant 0 : index
      %20 = vector.load %arg6[%c0_15, %c0_16] : memref<8x64xf32, #tpu.memory_space<vmem>>, vector<8x64xf32>
      tpu.vector_store %arg6[%c0_15, %c0_16], %19 {strides = array<i32>} : memref<8x64xf32, #tpu.memory_space<vmem>>, vector<8x64xf32>,
    } else {
    }
    return
  }
  func.func @transform_0(%arg0: i32, %arg1: i32, %arg2: i32) -> (i32, i32) {
    %c0_i32 = arith.constant 0 : i32
    return %arg0, %arg2 : i32, i32
  }
  func.func @transform_1(%arg0: i32, %arg1: i32, %arg2: i32) -> (i32, i32) {
    %c0_i32 = arith.constant 0 : i32
    return %arg2, %arg1 : i32, i32
  }
  func.func @transform_2(%arg0: i32, %arg1: i32, %arg2: i32) -> (i32, i32) {
    %c0_i32 = arith.constant 0 : i32
    %c0_i32_0 = arith.constant 0 : i32
    return %c0_i32, %arg1 : i32, i32
  }
  func.func @transform_3(%arg0: i32, %arg1: i32, %arg2: i32) -> (i32, i32) {
    %c0_i32 = arith.constant 0 : i32
    return %arg0, %arg1 : i32, i32
  }
}

</mosaic_0001>

<llo_original>
// kernel: tpu_custom_call.1
$region0: #{tpu_custom_call.1}
  #allocation0 [shape = 'u32[]', space=smem, size = 0x4, offset = 0x4, fixed_abs, tag = 'smem constant byte address 0x4 - core index']
  #allocation1 [shape = 'u32[144,128]{1,0:T(1,128)}', space=vmem, size = 0x12000, scoped, tag = 'internal scratch']
  #allocation2 [shape = 'f32[8,64]{1,0:T(8,128)}', space=vmem, size = 0x1000, scoped, tag = 'scratch operand']
  %s0 = inlined_call_operand.hbm [shape: f32[8,32], index: 0, kind: input, shape index: {}]
  %s1 = inlined_call_operand.hbm [shape: bf16[32,64], index: 1, kind: input, shape index: {}]
  %s2 = inlined_call_operand.vmem [shape: f32[1,64], index: 2, kind: input, shape index: {}]
  %s3 = inlined_call_operand.hbm [shape: f32[8,64], index: 3, kind: output, shape index: {}]
  %s4 = sld [smem:[#allocation0]]
  $region38: #{tpu_custom_call.1} parent=0
    _
  %s6 = ssub.s32 1, %s4
  %s7 = scalar_select 0, %s6, %s4
  $region1: #{tpu_custom_call.1} parent=0
    #allocation3 [shape = 'u8[4096]{0}', space=vmem, size = 0x1000, scoped, tag = 'input window, operand 0, single buffered']
    #allocation4 [shape = 's32[1]{0}', space=sflag, size = 0x4, scoped, tag = 'scoped memory for tpu_custom_call.1']
    #allocation5 [shape = 's32[1]{0}', space=sflag, size = 0x4, scoped, tag = 'scoped memory for tpu_custom_call.1']
    #allocation6 [shape = 'u8[8192]{0}', space=vmem, size = 0x2000, scoped, tag = 'input window, operand 1, single buffered']
    #allocation7 [shape = 's32[1]{0}', space=sflag, size = 0x4, scoped, tag = 'scoped memory for tpu_custom_call.1']
    #allocation8 [shape = 'u8[4096]{0}', space=vmem, size = 0x1000, scoped, tag = 'output window, operand 0, single buffered']
    %8 = vsyncpa [#allocation4], 0
    %9 = vsyncpa [#allocation7], 0
    %10 = vsyncpa [#allocation5], 0
    // Predicated region
    $region2: #{tpu_custom_call.1} parent=1 // pred_check
      _
    $region3: #{tpu_custom_call.1} parent=1 // pred_check_branch
      %12 = sbr.rel (0) target = $region5
    $region4: #{tpu_custom_call.1} parent=1 // pred_region
      %s14 = ssub.s32 128, 128
      %15 = vsyncadd [#allocation4], %s14
      %s17 = sshll.u32 [#allocation3], 4
      %s18 = int_to_ptr.vmem [resolvable:$true] %s17
      %20 = dma.hbm_to_vmem [thread:$0]  %s0, 128, %s18, [#allocation4]
    $region5: #{tpu_custom_call.1} parent=1 // pred_fallthru
      _
    // Predicated region
    $region6: #{tpu_custom_call.1} parent=1 // pred_check
      _
    $region7: #{tpu_custom_call.1} parent=1 // pred_check_branch
      %22 = sbr.rel (0) target = $region9
    $region8: #{tpu_custom_call.1} parent=1 // pred_region
      %s24 = ssub.s32 256, 256
      %25 = vsyncadd [#allocation7], %s24
      %s26 = sshll.u32 [#allocation6], 4
      %s27 = int_to_ptr.vmem [resolvable:$true] %s26
      %32 = dma.hbm_to_vmem [thread:$0]  %s1, 256, %s27, [#allocation7], 64, 64, 4
    $region9: #{tpu_custom_call.1} parent=1 // pred_fallthru
      _
    // Predicated region
    $region10: #{tpu_custom_call.1} parent=1 // pred_check
      _
    $region11: #{tpu_custom_call.1} parent=1 // pred_check_branch
      %34 = sbr.rel (0) target = $region13
    $region12: #{tpu_custom_call.1} parent=1 // pred_region
      _
    $region13: #{tpu_custom_call.1} parent=1 // pred_fallthru
      _
    // Predicated region
    $region14: #{tpu_custom_call.1} parent=1 // pred_check
      _
    $region15: #{tpu_custom_call.1} parent=1 // pred_check_branch
      %36 = sbr.rel (0) target = $region17
    $region16: #{tpu_custom_call.1} parent=1 // pred_region
      %37 = dma.done [#allocation4], 128
    $region17: #{tpu_custom_call.1} parent=1 // pred_fallthru
      _
    // Predicated region
    $region18: #{tpu_custom_call.1} parent=1 // pred_check
      _
    $region19: #{tpu_custom_call.1} parent=1 // pred_check_branch
      %39 = sbr.rel (0) target = $region21
    $region20: #{tpu_custom_call.1} parent=1 // pred_region
      %40 = dma.done [#allocation7], 256
    $region21: #{tpu_custom_call.1} parent=1 // pred_fallthru
      _
    %p42 = scmp.eq.s32.totalorder 0, 0
    // Predicated region
    $region22: #{tpu_custom_call.1} parent=1 // pred_check
      %p43 = pneg %p42
    $region23: #{tpu_custom_call.1} parent=1 // pred_check_branch
      %45 = sbr.rel (%p43) target = $region25
    $region24: #{tpu_custom_call.1} parent=1 // pred_region
      %vm46 = vcmask 523264
      %47 = vst.msk [vmem:[#allocation2] sm:$0xff] %vm46, 0.0
    $region25: #{tpu_custom_call.1} parent=1 // pred_fallthru
      _
    %v48 = vld [vmem:[#allocation2] sm:$0xff]
    %v49 = vld [vmem:[#allocation3] sm:$0xff]
    %v50 = vpack.c.bf16 %v49, %v49
    %v51 = vld [vmem:[#allocation6] sm:$0xf]
    %v52 = vld [vmem:[#allocation6 + $0x4] sm:$0xf]
    %v53 = vld [vmem:[#allocation6 + $0x8] sm:$0xf]
    %v54 = vld [vmem:[#allocation6 + $0xc] sm:$0xf]
    %v59 = vunpack.c.l.b16 %v51
    %v60 = vunpack.c.l.b16 %v52
    %v61 = vunpack.c.l.b16 %v53
    %v62 = vunpack.c.l.b16 %v54
    %v63 = vpack.c.b16 %v60, %v59
    %v64 = vpack.c.b16 %v62, %v61
    %vm67 = vcmask 261120
    %v69 = vsel %vm67, %v50, 0
    %71 = vmatprep.subr.bf16.mxu0 0
    %72 = vmatpush1.bf16.msra.mxu0 %v63
    %73 = vmatprep.subr.bf16.mxu0 0
    %74 = vmatpush1.bf16.msra.mxu0 %v64
    %75 = vmatprep.subr.bf16.mxu0 0
    %76 = vmatpush1.bf16.msra.mxu0 0
    %77 = vmatprep.subr.bf16.mxu0 0
    %78 = vmatpush1.bf16.msra.mxu0 0
    %79 = vmatprep.subr.bf16.mxu0 0
    %80 = vmatpush1.bf16.msra.mxu0 0
    %81 = vmatprep.subr.bf16.mxu0 0
    %82 = vmatpush1.bf16.msra.mxu0 0
    %83 = vmatprep.subr.bf16.mxu0 0
    %84 = vmatpush1.bf16.msra.mxu0 0
    %85 = vmatprep.subr.bf16.mxu0 0
    %86 = vmatpush1.bf16.msra.mxu0 0
    %87 = vmatprep.subr.bf16.mxu0 0
    %88 = vmatpush1.bf16.msra.mxu0 0
    %89 = vmatprep.subr.bf16.mxu0 0
    %90 = vmatpush1.bf16.msra.mxu0 0
    %91 = vmatprep.subr.bf16.mxu0 0
    %92 = vmatpush1.bf16.msra.mxu0 0
    %93 = vmatprep.subr.bf16.mxu0 0
    %94 = vmatpush1.bf16.msra.mxu0 0
    %95 = vmatprep.subr.bf16.mxu0 0
    %96 = vmatpush1.bf16.msra.mxu0 0
    %97 = vmatprep.subr.bf16.mxu0 0
    %98 = vmatpush1.bf16.msra.mxu0 0
    %99 = vmatprep.subr.bf16.mxu0 0
    %100 = vmatpush1.bf16.msra.mxu0 0
    %101 = vmatprep.subr.bf16.mxu0 0
    %102 = vmatpush1.bf16.msra.mxu0 0
    %103 = vmatprep.mubr.bf16.mxu0 0
    %104 = vmatmul.mubr.bf16.gmra.mrb[0].mxu0 %v69
    %v105 = vpop.f32.mrb[0].mxu0
    %v106 = vadd.f32 0.0, %v105
    %v107 = vpop.f32.mrb[0].mxu0
    %v108 = vpop.f32.mrb[0].mxu0
    %v109 = vpop.f32.mrb[0].mxu0
    %110 = vdwg.mxu0
    %v111 = vadd.f32 %v48, %v106
    %vm112 = vcmask 523264
    %113 = vst.msk [vmem:[#allocation2] sm:$0xff] %vm112, %v111
    // Predicated region
    $region26: #{tpu_custom_call.1} parent=1 // pred_check
      %p114 = pneg %p42
    $region27: #{tpu_custom_call.1} parent=1 // pred_check_branch
      %116 = sbr.rel (%p114) target = $region29
    $region28: #{tpu_custom_call.1} parent=1 // pred_region
      %v117 = vld [vmem:[#allocation2] sm:$0xff]
      %v118 = vld [vmem:[%s2] sm:$0x1]
      %v120 = vlaneseq
      %v121 = vshrl.u32 %v120, 7
      %v122 = vsub.s32 0, %v121
      %v123 = vrot.slane %v118, %v122
      %v125 = vadd.f32 %v117, %v123
      %v126 = vand.u32 2147483647, %v125
      %vm127 = vcmp.le.f32.partialorder %v126, 0.7853982
      %vm128 = vcmp.lt.s32.totalorder %v125, 0
      %v129 = vand.u32 %v125, 2139095040
      %v130 = vshrl.u32 %v129, 23
      %v131 = vsub.s32 %v130, 127
      %v132 = vand.u32 2147483647, %v125
      %v133 = vand.u32 %v132, 8388607
      %v134 = vor.u32 %v133, 8388608
      %v135 = vsub.s32 0, %v134
      %v136 = vadd.s32 %v131, 1
      %vm137 = vcmp.gt.s32.totalorder %v136, 0
      %v138 = vsel %vm137, %v136, 0
      %v139 = vshrl.u32 %v138, 5
      %v140 = vand.u32 %v138, 31
      %v141 = vsub.s32 32, %v140
      %v142 = vshrl.u32 683565275, %v141
      %v143 = vshll.u32 683565275, %v140
      %v144 = vshrl.u32 2475754826, %v141
      %v145 = vor.u32 %v143, %v144
      %v146 = vshll.u32 2475754826, %v140
      %v147 = vshrl.u32 2131351028, %v141
      %v148 = vor.u32 %v146, %v147
      %v149 = vshll.u32 2131351028, %v140
      %v150 = vshrl.u32 2102212464, %v141
      %v151 = vor.u32 %v149, %v150
      %v152 = vshll.u32 2102212464, %v140
      %v153 = vshrl.u32 920167782, %v141
      %v154 = vor.u32 %v152, %v153
      %v155 = vshll.u32 920167782, %v140
      %v156 = vshrl.u32 1326507024, %v141
      %v157 = vor.u32 %v155, %v156
      %vm158 = vcmp.lt.s32.totalorder %v139, 1
      %vm159 = vcmp.lt.s32.totalorder %v139, 2
      %vm160 = vcmp.lt.s32.totalorder %v139, 3
      %vm161 = vcmp.lt.s32.totalorder %v139, 4
      %v162 = vsel %vm158, %v142, %v145
      %v163 = vsel %vm161, %v151, 2102212464
      %v164 = vsel %vm160, %v148, %v163
      %v165 = vsel %vm159, %v162, %v164
      %v166 = vsel %vm158, %v145, %v148
      %v167 = vsel %vm161, %v154, 920167782
      %v168 = vsel %vm160, %v151, %v167
      %v169 = vsel %vm159, %v166, %v168
      %v170 = vsel %vm158, %v148, %v151
      %v171 = vsel %vm161, %v157, 1326507024
      %v172 = vsel %vm160, %v154, %v171
      %v173 = vsel %vm159, %v170, %v172
      %v174 = vshll.u32 %v134, 8
      %v175 = vmul.u32.u64.compose %v174, %v173
      %v176 = vextract.low.u32 %v175
      %v177 = vextract.high.u32 %v175
      %v178 = vmul.u32.u64.compose %v174, %v169
      %v179 = vextract.low.u32 %v178
      %v180 = vextract.high.u32 %v178
      %v181 = vmul.u32 %v174, %v165
      %v182 = vadd.s32 %v177, %v179
      %vm183 = vc.u32 %v177, %v179
      %v184 = vadd.s32 %v180, 1
      %v185 = vsel %vm183, %v184, %v180
      %v186 = vadd.s32 %v181, %v185
      %v187 = vadd.s32 %v186, 536870912
      %v188 = vshrl.u32 %v187, 30
      %v189 = vshll.u32 %v188, 30
      %v190 = vsub.s32 %v186, %v189
      %vm191 = vcmp.lt.s32.totalorder %v190, 0
      %v192 = vsub.s32 0, %v190
      %v193 = vsel %vm191, %v192, %v190
      %v194 = vclz %v193
      %v195 = vsub.s32 %v194, 2
      %vm196 = vcmp.gt.s32.totalorder 0, %v195
      %v197 = vsel %vm196, 0, %v195
      %v198 = vsub.s32 32, %v197
      %v199 = vshll.u32 %v190, %v197
      %v200 = vshrl.u32 %v182, %v198
      %v201 = vor.u32 %v199, %v200
      %v202 = vsub.s32 4294967266, %v197
      %v203 = vadd.s32 %v202, 127
      %v204 = vshll.u32 %v203, 23
      %v205 = vor.u32 4788187, %v204
      %v206 = vand.u32 2147483647, %v205
      %v208 = vcvt.s32.f32 %v201
      %v209 = vmul.f32 %v208, %v206
      %v210 = vxor.u32 %v209, 2147483648
      %v211 = vsel %vm128, %v210, %v209
      %v212 = vsub.s32 4, %v188
      %v213 = vsel %vm128, %v212, %v188
      %v214 = vsel %vm127, %v125, %v211
      %v215 = vsel %vm127, 0, %v213
      %v216 = vcosq.f32.pop %v214
      %v217 = vsinq.f32.pop %v214
      %vm218 = vweird.f32 %v125
      %v219 = vand.u32 %v215, 3
      %vm220 = vcmp.lt.s32.totalorder %v219, 2
      %vm221 = vcmp.eq.s32.totalorder %v219, 0
      %v222 = vxor.u32 %v217, 2147483648
      %v223 = vsel %vm221, %v216, %v222
      %vm224 = vcmp.eq.s32.totalorder %v219, 2
      %v225 = vxor.u32 %v216, 2147483648
      %v226 = vsel %vm224, %v225, %v217
      %v227 = vsel %vm220, %v223, %v226
      %v228 = vsel %vm218, nan, %v227
      %v229 = vmul.f32 %v228, 0.17677669
      %230 = vst.msk [vmem:[#allocation8] sm:$0xff] %vm112, %v229
    $region29: #{tpu_custom_call.1} parent=1 // pred_fallthru
      _
    // Predicated region
    $region30: #{tpu_custom_call.1} parent=1 // pred_check
      _
    $region31: #{tpu_custom_call.1} parent=1 // pred_check_branch
      %232 = sbr.rel (0) target = $region33
    $region32: #{tpu_custom_call.1} parent=1 // pred_region
      %s234 = ssub.s32 128, 128
      %235 = vsyncadd [#allocation5], %s234
      %s237 = sshll.u32 [#allocation8], 4
      %s238 = int_to_ptr.vmem [resolvable:$true] %s237
      %240 = dma.vmem_to_hbm [thread:$0]  %s238, 128, %s3, [#allocation5]
    $region33: #{tpu_custom_call.1} parent=1 // pred_fallthru
      _
    // Predicated region
    $region34: #{tpu_custom_call.1} parent=1 // pred_check
      _
    $region35: #{tpu_custom_call.1} parent=1 // pred_check_branch
      %242 = sbr.rel (0) target = $region37
    $region36: #{tpu_custom_call.1} parent=1 // pred_region
      %243 = dma.done [#allocation5], 128
    $region37: #{tpu_custom_call.1} parent=1 // pred_fallthru
      _
    %244 = vsyncpa [#allocation4], 1
    %245 = vsyncpa [#allocation7], 1
    %246 = vsyncpa [#allocation5], 1

</llo_original>
